<compile_context>
chip_gen: v6e
topology: v6e:2x2x1
jax: 0.10.0
libtpu: 0.0.40
codegen_flags: <defaults>
</compile_context>

<pallas_src>
import functools

import jax
import jax.numpy as jnp
from jax.experimental import pallas as pl
from jax.experimental.pallas import tpu as pltpu


def fc1_kernel(x_ref, w_ref, b_ref, o_ref, acc_ref):
    k = pl.program_id(2)

    @pl.when(k == 0)
    def _():
        acc_ref[...] = jnp.zeros_like(acc_ref)

    acc_ref[...] += jnp.dot(
        x_ref[...], w_ref[...], preferred_element_type=jnp.float32
    )

    @pl.when(k == pl.num_programs(2) - 1)
    def _():
        # Bias add + cast once per output tile (not per K step).
        o_ref[...] = (acc_ref[...] + b_ref[...]).astype(o_ref.dtype)


def _round_up(x, m):
    return (x + m - 1) // m * m


@functools.partial(jax.jit, static_argnames=("tm", "tn", "tk"))
def fc1_forward(x, w_t, b, *, tm=None, tn=None, tk=None):
    """Computes x @ w_t + b with a tiled Pallas kernel.

    x:   [B, in_dim]
    w_t: [in_dim, num_classes]   (transpose of torch nn.Linear weight)
    b:   [1, num_classes]
    """
    B, K = x.shape
    K2, N = w_t.shape
    assert K == K2 and b.shape == (1, N)

    # --- choose tile sizes (lane-dense N, (8,128)-aligned, v7x-VMEM-safe) ---
    n_pad = _round_up(max(N, 128), 128)
    if tn is None:
        tn = 256 if n_pad % 256 == 0 else 128
    if tm is None:
        tm = min(128, _round_up(B, 8))
    if tk is None:
        tk = min(512, _round_up(K, 128))
    m_pad = _round_up(B, tm)
    k_pad = _round_up(K, tk)

    # --- zero-pad operands (padded K contributes 0; padded M/N sliced off) ---
    xp = x if (m_pad == B and k_pad == K) else jnp.pad(
        x, ((0, m_pad - B), (0, k_pad - K)))
    wp = w_t if (k_pad == K and n_pad == N) else jnp.pad(
        w_t, ((0, k_pad - K), (0, n_pad - N)))
    bp = b if n_pad == N else jnp.pad(b, ((0, 0), (0, n_pad - N)))

    grid = (m_pad // tm, n_pad // tn, k_pad // tk)

    cost = pl.CostEstimate(
        flops=2 * m_pad * k_pad * n_pad,
        transcendentals=0,
        bytes_accessed=4 * (m_pad * k_pad + k_pad * n_pad + n_pad
                            + m_pad * n_pad),
    )

    out_padded = pl.pallas_call(
        fc1_kernel,
        out_shape=jax.ShapeDtypeStruct((m_pad, n_pad), x.dtype),
        grid_spec=pltpu.PrefetchScalarGridSpec(
            num_scalar_prefetch=0,
            grid=grid,
            in_specs=[
                pl.BlockSpec((tm, tk), lambda i, j, k: (i, k)),
                pl.BlockSpec((tk, tn), lambda i, j, k: (k, j)),
                pl.BlockSpec((1, tn), lambda i, j, k: (0, j)),
            ],
            out_specs=pl.BlockSpec((tm, tn), lambda i, j, k: (i, j)),
            scratch_shapes=[pltpu.VMEM((tm, tn), jnp.float32)],
        ),
        compiler_params=pltpu.CompilerParams(
            dimension_semantics=("parallel", "parallel", "arbitrary"),
            vmem_limit_bytes=32 * 1024 * 1024,
        ),
        cost_estimate=cost,
    )(xp, wp, bp)

    return out_padded[:B, :N]


if __name__ == "__main__":
    # Small but tiling-exercising shapes consistent with FC1(in_dim, num_classes):
    # feature-classifier style — a batch of flattened features -> class logits.
    B, in_dim, num_classes = 256, 1024, 16

    key = jax.random.PRNGKey(0)
    kx, kw, kb = jax.random.split(key, 3)

    # Mimic torch.nn.Linear default init: U(-1/sqrt(in_dim), 1/sqrt(in_dim)).
    bound = 1.0 / jnp.sqrt(jnp.float32(in_dim))
    x = jax.random.normal(kx, (B, in_dim), dtype=jnp.float32)
    # PyTorch weight is [num_classes, in_dim]; we store its transpose.
    w_t = jax.random.uniform(kw, (in_dim, num_classes), dtype=jnp.float32,
                             minval=-bound, maxval=bound)
    b = jax.random.uniform(kb, (1, num_classes), dtype=jnp.float32,
                           minval=-bound, maxval=bound)

    out = fc1_forward(x, w_t, b)
    out = jax.block_until_ready(out)

    # Reference check against plain JAX (same math as torch F.linear).
    ref = x @ w_t + b
    assert out.shape == (B, num_classes)
    assert jnp.allclose(out, ref, atol=1e-4, rtol=1e-4)

    print("KERNEL_OK")
</pallas_src>

<mosaic_0001>
module attributes {stable_mosaic.version = 11 : i64} {
  func.func @fc1_kernel(%arg0: i32, %arg1: i32, %arg2: i32, %arg3: memref<128x512xf32, #tpu.memory_space<vmem>>, %arg4: memref<512x128xf32, #tpu.memory_space<vmem>>, %arg5: memref<1x128xf32, #tpu.memory_space<vmem>>, %arg6: memref<128x128xf32, #tpu.memory_space<vmem>>, %arg7: memref<128x128xf32, #tpu.memory_space<vmem>>) attributes {dimension_semantics = [#tpu.dimension_semantics<parallel>, #tpu.dimension_semantics<parallel>, #tpu.dimension_semantics<arbitrary>], iteration_bounds = array<i64: 2, 1, 2>, scalar_prefetch = 0 : i64, scratch_operands = 1 : i64, tpu.core_type = #tpu.core_type<tc>, window_params = [{transform_indices = @transform_0, window_bounds = array<i64: 128, 512>}, {transform_indices = @transform_1, window_bounds = array<i64: 512, 128>}, {transform_indices = @transform_2, window_bounds = array<i64: 1, 128>}, {transform_indices = @transform_3, window_bounds = array<i64: 128, 128>}]} {
    %c0_i32 = arith.constant 0 : i32
    %0 = arith.cmpi eq, %arg2, %c0_i32 : i32
    %1 = arith.extui %0 : i1 to i32
    %c0_i32_0 = arith.constant 0 : i32
    %2 = arith.cmpi ne, %1, %c0_i32_0 : i32
    scf.if %2 {
      %cst_9 = arith.constant 0.000000e+00 : f32
      %12 = vector.broadcast %cst_9 : f32 to vector<128x128xf32>
      %c0_10 = arith.constant 0 : index
      %c0_11 = arith.constant 0 : index
      %13 = vector.load %arg7[%c0_10, %c0_11] : memref<128x128xf32, #tpu.memory_space<vmem>>, vector<128x128xf32>
      tpu.vector_store %arg7[%c0_10, %c0_11], %12 {strides = array<i32>} : memref<128x128xf32, #tpu.memory_space<vmem>>, vector<128x128xf32>,
    } else {
    }
    %c0 = arith.constant 0 : index
    %c0_1 = arith.constant 0 : index
    %3 = vector.load %arg7[%c0, %c0_1] : memref<128x128xf32, #tpu.memory_space<vmem>>, vector<128x128xf32>
    %c0_2 = arith.constant 0 : index
    %c0_3 = arith.constant 0 : index
    %4 = vector.load %arg3[%c0_2, %c0_3] : memref<128x512xf32, #tpu.memory_space<vmem>>, vector<128x512xf32>
    %c0_4 = arith.constant 0 : index
    %c0_5 = arith.constant 0 : index
    %5 = vector.load %arg4[%c0_4, %c0_5] : memref<512x128xf32, #tpu.memory_space<vmem>>, vector<512x128xf32>
    %cst = arith.constant dense<0.000000e+00> : vector<128x128xf32>
    %6 = tpu.matmul %4, %5, %cst {dimension_numbers = #tpu.dot_dimension_numbers<[1], [0], [0], [1], [0, 0, 1, 1], [], []>} : vector<128x512xf32>, vector<512x128xf32>, vector<128x128xf32> -> vector<128x128xf32>
    %7 = arith.addf %3, %6 : vector<128x128xf32>
    %c0_6 = arith.constant 0 : index
    %c0_7 = arith.constant 0 : index
    %8 = vector.load %arg7[%c0_6, %c0_7] : memref<128x128xf32, #tpu.memory_space<vmem>>, vector<128x128xf32>
    tpu.vector_store %arg7[%c0_6, %c0_7], %7 {strides = array<i32>} : memref<128x128xf32, #tpu.memory_space<vmem>>, vector<128x128xf32>,
    %c1_i32 = arith.constant 1 : i32
    %9 = arith.cmpi eq, %arg2, %c1_i32 : i32
    %10 = arith.extui %9 : i1 to i32
    %c0_i32_8 = arith.constant 0 : i32
    %11 = arith.cmpi ne, %10, %c0_i32_8 : i32
    scf.if %11 {
      %c0_9 = arith.constant 0 : index
      %c0_10 = arith.constant 0 : index
      %12 = vector.load %arg7[%c0_9, %c0_10] : memref<128x128xf32, #tpu.memory_space<vmem>>, vector<128x128xf32>
      %c0_11 = arith.constant 0 : index
      %c0_12 = arith.constant 0 : index
      %13 = vector.load %arg5[%c0_11, %c0_12] : memref<1x128xf32, #tpu.memory_space<vmem>>, vector<1x128xf32>
      %14 = vector.broadcast %13 : vector<1x128xf32> to vector<128x128xf32>
      %15 = arith.addf %12, %14 : vector<128x128xf32>
      %c0_13 = arith.constant 0 : index
      %c0_14 = arith.constant 0 : index
      %16 = vector.load %arg6[%c0_13, %c0_14] : memref<128x128xf32, #tpu.memory_space<vmem>>, vector<128x128xf32>
      tpu.vector_store %arg6[%c0_13, %c0_14], %15 {strides = array<i32>} : memref<128x128xf32, #tpu.memory_space<vmem>>, vector<128x128xf32>,
    } else {
    }
    return
  }
  func.func @transform_0(%arg0: i32, %arg1: i32, %arg2: i32) -> (i32, i32) {
    %c0_i32 = arith.constant 0 : i32
    return %arg0, %arg2 : i32, i32
  }
  func.func @transform_1(%arg0: i32, %arg1: i32, %arg2: i32) -> (i32, i32) {
    %c0_i32 = arith.constant 0 : i32
    return %arg2, %arg1 : i32, i32
  }
  func.func @transform_2(%arg0: i32, %arg1: i32, %arg2: i32) -> (i32, i32) {
    %c0_i32 = arith.constant 0 : i32
    %c0_i32_0 = arith.constant 0 : i32
    return %c0_i32, %arg1 : i32, i32
  }
  func.func @transform_3(%arg0: i32, %arg1: i32, %arg2: i32) -> (i32, i32) {
    %c0_i32 = arith.constant 0 : i32
    return %arg0, %arg1 : i32, i32
  }
}

</mosaic_0001>

<llo_original>
// kernel: fc1_forward.1
$region0: #{fc1_forward.1}
  #allocation0 [shape = 'u32[]', space=smem, size = 0x4, offset = 0x4, fixed_abs, tag = 'smem constant byte address 0x4 - core index']
  #allocation1 [shape = 'u32[144,128]{1,0:T(1,128)}', space=vmem, size = 0x12000, scoped, tag = 'internal scratch']
  #allocation2 [shape = 'f32[128,128]{1,0:T(8,128)}', space=vmem, size = 0x10000, scoped, tag = 'scratch operand']
  %s0 = inlined_call_operand.vmem [shape: f32[256,1024], index: 0, kind: input, shape index: {}]
  %s1 = inlined_call_operand.vmem [shape: f32[1024,128], index: 1, kind: input, shape index: {}]
  %s2 = inlined_call_operand.vmem [shape: f32[1,128], index: 2, kind: input, shape index: {}]
  %s3 = inlined_call_operand.vmem [shape: f32[256,128], index: 3, kind: output, shape index: {}]
  %s4 = sld [smem:[#allocation0]]
  $region76: #{fc1_forward.1} parent=0
    _
  %s6 = ssub.s32 1, %s4
  %s7 = scalar_select 0, %s6, %s4
  $region1: #{fc1_forward.1} parent=0
    #allocation3 [shape = 'u8[524288]{0}', space=vmem, size = 0x80000, scoped, tag = 'input window, operand 0']
    loop: start=0, step=1, limit=6
    $region2: #{fc1_forward.1} parent=1 // loop_pre_header
      _
    $region3: #{fc1_forward.1} parent=1 // loop_header
      %s9 = sphi 0, %s13
      %p10 = scmp.ge.s32.totalorder %s9, 6
      %s16 = sphi 0, %s35
      %s17 = sphi 0, %s31
      %s18 = sphi 0, %s27
      %s19 = sphi 0, %s16
      %s20 = sphi 0, %s17
      %s21 = sphi 0, %s18
      %s22 = sphi 0, %s19
      %s23 = sphi 0, %s20
      %s24 = sphi 0, %s21
      %s40 = sphi 0, %s42
      %s43 = sphi 0, %s40
      %s44 = sphi 0, %s43
      %s60 = sphi 0, %s44
      %s68 = sphi 0, %s70
      %s71 = sphi 0, %s68
      %s72 = sphi 0, %s71
      %s88 = sphi 0, %s72
      %s94 = sphi 0, %s96
      %s97 = sphi 0, %s94
      %s98 = sphi 0, %s97
      %s114 = sphi 0, %s98
      %s122 = sphi 0, %s124
      %s125 = sphi 0, %s122
      %s126 = sphi 0, %s125
      %s142 = sphi 0, %s126
    $region4: #{fc1_forward.1} parent=1 // loop_header_branch
      %12 = sbr.rel (%p10) target = $region8
    $region5: #{fc1_forward.1} parent=1 // loop_body
      %s14 = ssub.s32 %s9, 1
      %s15 = ssub.s32 %s9, 2
      %s25 = sadd.s32 1, %s18
      %p26 = scmp.ge.s32.totalorder %s25, 2
      %s27 = scalar_select %p26, 0, %s25
      %s28 = sadd.s32 1, %s17
      %s29 = scalar_select %p26, %s28, %s17
      %p30 = scmp.ge.s32.totalorder %s29, 1
      %s31 = scalar_select %p30, 0, %s29
      %s32 = sadd.s32 1, %s16
      %s33 = scalar_select %p30, %s32, %s16
      %p34 = scmp.ge.s32.totalorder %s33, 2
      %s35 = scalar_select %p34, 0, %s33
      %s36 = ssub.s32 %s16, %s35
      %s37 = ssub.s32 %s18, %s27
      %s38 = sor.u32 %s36, %s37
      %p39 = scmp.eq.s32.totalorder %s38, 0
      %s41 = sadd.s32 %s40, 1
      %s42 = scalar_select %p39, %s40, %s41
      %p45 = pneg %p39
      %p46 = scmp.eq.s32.totalorder %s9, 3
      %p47 = por %p45, %p46
      %p48 = scmp.ne.s32.totalorder %s40, %s43
      %p49 = scmp.eq.s32.totalorder %s9, 0
      %p50 = por %p48, %p49
      %p51 = scmp.ne.s32.totalorder %s40, %s43
      %p52 = scmp.eq.s32.totalorder %s14, 3
      %p53 = por %p51, %p52
      %p54 = scmp.ne.s32.totalorder %s43, %s44
      %p55 = scmp.eq.s32.totalorder %s14, 0
      %p56 = por %p54, %p55
      %p57 = scmp.ne.s32.totalorder %s43, %s44
      %p58 = scmp.eq.s32.totalorder %s15, 3
      %p59 = por %p57, %p58
      %p61 = scmp.ne.s32.totalorder %s44, %s60
      %p62 = scmp.eq.s32.totalorder %s15, 0
      %p63 = por %p61, %p62
      %s64 = ssub.s32 %s18, %s27
      %s65 = ssub.s32 %s17, %s31
      %s66 = sor.u32 %s64, %s65
      %p67 = scmp.eq.s32.totalorder %s66, 0
      %s69 = sadd.s32 %s68, 1
      %s70 = scalar_select %p67, %s68, %s69
      %p73 = pneg %p67
      %p74 = scmp.eq.s32.totalorder %s9, 3
      %p75 = por %p73, %p74
      %p76 = scmp.ne.s32.totalorder %s68, %s71
      %p77 = scmp.eq.s32.totalorder %s9, 0
      %p78 = por %p76, %p77
      %p79 = scmp.ne.s32.totalorder %s68, %s71
      %p80 = scmp.eq.s32.totalorder %s14, 3
      %p81 = por %p79, %p80
      %p82 = scmp.ne.s32.totalorder %s71, %s72
      %p83 = scmp.eq.s32.totalorder %s14, 0
      %p84 = por %p82, %p83
      %p85 = scmp.ne.s32.totalorder %s71, %s72
      %p86 = scmp.eq.s32.totalorder %s15, 3
      %p87 = por %p85, %p86
      %p89 = scmp.ne.s32.totalorder %s72, %s88
      %p90 = scmp.eq.s32.totalorder %s15, 0
      %p91 = por %p89, %p90
      %s92 = ssub.s32 %s17, %s31
      %p93 = scmp.eq.s32.totalorder %s92, 0
      %s95 = sadd.s32 %s94, 1
      %s96 = scalar_select %p93, %s94, %s95
      %p99 = pneg %p93
      %p100 = scmp.eq.s32.totalorder %s9, 3
      %p101 = por %p99, %p100
      %p102 = scmp.ne.s32.totalorder %s94, %s97
      %p103 = scmp.eq.s32.totalorder %s9, 0
      %p104 = por %p102, %p103
      %p105 = scmp.ne.s32.totalorder %s94, %s97
      %p106 = scmp.eq.s32.totalorder %s14, 3
      %p107 = por %p105, %p106
      %p108 = scmp.ne.s32.totalorder %s97, %s98
      %p109 = scmp.eq.s32.totalorder %s14, 0
      %p110 = por %p108, %p109
      %p111 = scmp.ne.s32.totalorder %s97, %s98
      %p112 = scmp.eq.s32.totalorder %s15, 3
      %p113 = por %p111, %p112
      %p115 = scmp.ne.s32.totalorder %s98, %s114
      %p116 = scmp.eq.s32.totalorder %s15, 0
      %p117 = por %p115, %p116
      %s118 = ssub.s32 %s16, %s35
      %s119 = ssub.s32 %s17, %s31
      %s120 = sor.u32 %s118, %s119
      %p121 = scmp.eq.s32.totalorder %s120, 0
      %s123 = sadd.s32 %s122, 1
      %s124 = scalar_select %p121, %s122, %s123
      %p127 = pneg %p121
      %p128 = scmp.eq.s32.totalorder %s9, 3
      %p129 = por %p127, %p128
      %p130 = scmp.ne.s32.totalorder %s122, %s125
      %p131 = scmp.eq.s32.totalorder %s9, 0
      %p132 = por %p130, %p131
      %p133 = scmp.ne.s32.totalorder %s122, %s125
      %p134 = scmp.eq.s32.totalorder %s14, 3
      %p135 = por %p133, %p134
      %p136 = scmp.ne.s32.totalorder %s125, %s126
      %p137 = scmp.eq.s32.totalorder %s14, 0
      %p138 = por %p136, %p137
      %p139 = scmp.ne.s32.totalorder %s125, %s126
      %p140 = scmp.eq.s32.totalorder %s15, 3
      %p141 = por %p139, %p140
      %p143 = scmp.ne.s32.totalorder %s126, %s142
      %p144 = scmp.eq.s32.totalorder %s15, 0
      %p145 = por %p143, %p144
      %p146 = scmp.le.s32.totalorder 1, %s9
      %p147 = scmp.lt.s32.totalorder %s9, 5
      %p148 = pnand %p146, %p147
      %p149 = pneg %p148
      // Predicated region
      $region9: #{fc1_forward.1} parent=5 // pred_check
        _
      $region10: #{fc1_forward.1} parent=5 // pred_check_branch
        %151 = sbr.rel (%p148) target = $region12
      $region11: #{fc1_forward.1} parent=5 // pred_region
        %s152 = ssub.s32 %s9, 1
        // Predicated region
        $region13: #{fc1_forward.1} parent=11 // pred_check
          %p153 = pneg %p110
        $region14: #{fc1_forward.1} parent=11 // pred_check_branch
          %155 = sbr.rel (%p153) target = $region16
        $region15: #{fc1_forward.1} parent=11 // pred_region
          %p156 = scmp.lt.s32.totalorder %s20, 0
          %s157 = scalar_select %p156, %s20, 0
          %s158 = scalar_lea.vmem %s2, %s157
        $region16: #{fc1_forward.1} parent=11 // pred_fallthru
          _
      $region12: #{fc1_forward.1} parent=5 // pred_fallthru
        _
      %p159 = scmp.lt.s32.totalorder %s9, 4
      // Predicated region
      $region17: #{fc1_forward.1} parent=5 // pred_check
        %p160 = pneg %p159
      $region18: #{fc1_forward.1} parent=5 // pred_check_branch
        %162 = sbr.rel (%p160) target = $region20
      $region19: #{fc1_forward.1} parent=5 // pred_region
        // Predicated region
        $region21: #{fc1_forward.1} parent=19 // pred_check
          %p163 = pneg %p50
        $region22: #{fc1_forward.1} parent=19 // pred_check_branch
          %165 = sbr.rel (%p163) target = $region24
        $region23: #{fc1_forward.1} parent=19 // pred_region
          %s166 = sand.u32 %s40, 1
          %s167 = sand.u32 %s40, 1
          %s168 = smul.addr %s167, 512
          %s169 = scalar_lea.vmem [#allocation3], %s168
          %s170 = smul.u32 16, %s16
          %s171 = smul.u32 4, %s18
          %s172 = smul.addr %s170, 8
          %s173 = sadd.s32 %s171, %s172
          %s174 = smul.addr %s173, 8
          %s175 = scalar_lea.vmem %s0, %s174
          // Predicated region
          $region25: #{fc1_forward.1} parent=23 // pred_check
            _
          $region26: #{fc1_forward.1} parent=23 // pred_check_branch
            %177 = sbr.rel (0) target = $region28
          $region27: #{fc1_forward.1} parent=23 // pred_region
            // Predicated region
            $region29: #{fc1_forward.1} parent=27 // pred_check
              _
            $region30: #{fc1_forward.1} parent=27 // pred_check_branch
              %179 = sbr.rel (0) target = $region32
            $region31: #{fc1_forward.1} parent=27 // pred_region
              loop: start=0, step=1, limit=1
              $region33: #{fc1_forward.1} parent=31 // loop_pre_header
                _
              $region34: #{fc1_forward.1} parent=31 // loop_header
                %s181 = sphi 0, %s185
                %p182 = scmp.ge.s32.totalorder %s181, 1
                %s186 = sphi %s175, %s175
                %s187 = sphi %s169, %s169
              $region35: #{fc1_forward.1} parent=31 // loop_header_branch
                %184 = sbr.rel (%p182) target = $region39
              $region36: #{fc1_forward.1} parent=31 // loop_body
                %v188 = vld [vmem:[%s186] sm:$0xff]
                %189 = vst [vmem:[%s187] sm:$0xff] %v188
                %v190 = vld [vmem:[%s186 + $0x8] sm:$0xff]
                %191 = vst [vmem:[%s187 + $0x8] sm:$0xff] %v190
                %v192 = vld [vmem:[%s186 + $0x10] sm:$0xff]
                %193 = vst [vmem:[%s187 + $0x10] sm:$0xff] %v192
                %v194 = vld [vmem:[%s186 + $0x18] sm:$0xff]
                %195 = vst [vmem:[%s187 + $0x18] sm:$0xff] %v194
                %v196 = vld [vmem:[%s186 + $0x40] sm:$0xff]
                %197 = vst [vmem:[%s187 + $0x20] sm:$0xff] %v196
                %v198 = vld [vmem:[%s186 + $0x48] sm:$0xff]
                %199 = vst [vmem:[%s187 + $0x28] sm:$0xff] %v198
                %v200 = vld [vmem:[%s186 + $0x50] sm:$0xff]
                %201 = vst [vmem:[%s187 + $0x30] sm:$0xff] %v200
                %v202 = vld [vmem:[%s186 + $0x58] sm:$0xff]
                %203 = vst [vmem:[%s187 + $0x38] sm:$0xff] %v202
                %v204 = vld [vmem:[%s186 + $0x80] sm:$0xff]
                %205 = vst [vmem:[%s187 + $0x40] sm:$0xff] %v204
                %v206 = vld [vmem:[%s186 + $0x88] sm:$0xff]
                %207 = vst [vmem:[%s187 + $0x48] sm:$0xff] %v206
                %v208 = vld [vmem:[%s186 + $0x90] sm:$0xff]
                %209 = vst [vmem:[%s187 + $0x50] sm:$0xff] %v208
                %v210 = vld [vmem:[%s186 + $0x98] sm:$0xff]
                %211 = vst [vmem:[%s187 + $0x58] sm:$0xff] %v210
                %v212 = vld [vmem:[%s186 + $0xc0] sm:$0xff]
                %213 = vst [vmem:[%s187 + $0x60] sm:$0xff] %v212
                %v214 = vld [vmem:[%s186 + $0xc8] sm:$0xff]
                %215 = vst [vmem:[%s187 + $0x68] sm:$0xff] %v214
                %v216 = vld [vmem:[%s186 + $0xd0] sm:$0xff]
                %217 = vst [vmem:[%s187 + $0x70] sm:$0xff] %v216
                %v218 = vld [vmem:[%s186 + $0xd8] sm:$0xff]
                %219 = vst [vmem:[%s187 + $0x78] sm:$0xff] %v218
                %v220 = vld [vmem:[%s186 + $0x100] sm:$0xff]
                %221 = vst [vmem:[%s187 + $0x80] sm:$0xff] %v220
                %v222 = vld [vmem:[%s186 + $0x108] sm:$0xff]
                %223 = vst [vmem:[%s187 + $0x88] sm:$0xff] %v222
                %v224 = vld [vmem:[%s186 + $0x110] sm:$0xff]
                %225 = vst [vmem:[%s187 + $0x90] sm:$0xff] %v224
                %v226 = vld [vmem:[%s186 + $0x118] sm:$0xff]
                %227 = vst [vmem:[%s187 + $0x98] sm:$0xff] %v226
                %v228 = vld [vmem:[%s186 + $0x140] sm:$0xff]
                %229 = vst [vmem:[%s187 + $0xa0] sm:$0xff] %v228
                %v230 = vld [vmem:[%s186 + $0x148] sm:$0xff]
                %231 = vst [vmem:[%s187 + $0xa8] sm:$0xff] %v230
                %v232 = vld [vmem:[%s186 + $0x150] sm:$0xff]
                %233 = vst [vmem:[%s187 + $0xb0] sm:$0xff] %v232
                %v234 = vld [vmem:[%s186 + $0x158] sm:$0xff]
                %235 = vst [vmem:[%s187 + $0xb8] sm:$0xff] %v234
                %v236 = vld [vmem:[%s186 + $0x180] sm:$0xff]
                %237 = vst [vmem:[%s187 + $0xc0] sm:$0xff] %v236
                %v238 = vld [vmem:[%s186 + $0x188] sm:$0xff]
                %239 = vst [vmem:[%s187 + $0xc8] sm:$0xff] %v238
                %v240 = vld [vmem:[%s186 + $0x190] sm:$0xff]
                %241 = vst [vmem:[%s187 + $0xd0] sm:$0xff] %v240
                %v242 = vld [vmem:[%s186 + $0x198] sm:$0xff]
                %243 = vst [vmem:[%s187 + $0xd8] sm:$0xff] %v242
                %v244 = vld [vmem:[%s186 + $0x1c0] sm:$0xff]
                %245 = vst [vmem:[%s187 + $0xe0] sm:$0xff] %v244
                %v246 = vld [vmem:[%s186 + $0x1c8] sm:$0xff]
                %247 = vst [vmem:[%s187 + $0xe8] sm:$0xff] %v246
                %v248 = vld [vmem:[%s186 + $0x1d0] sm:$0xff]
                %249 = vst [vmem:[%s187 + $0xf0] sm:$0xff] %v248
                %v250 = vld [vmem:[%s186 + $0x1d8] sm:$0xff]
                %251 = vst [vmem:[%s187 + $0xf8] sm:$0xff] %v250
                %v252 = vld [vmem:[%s186 + $0x200] sm:$0xff]
                %253 = vst [vmem:[%s187 + $0x100] sm:$0xff] %v252
                %v254 = vld [vmem:[%s186 + $0x208] sm:$0xff]
                %255 = vst [vmem:[%s187 + $0x108] sm:$0xff] %v254
                %v256 = vld [vmem:[%s186 + $0x210] sm:$0xff]
                %257 = vst [vmem:[%s187 + $0x110] sm:$0xff] %v256
                %v258 = vld [vmem:[%s186 + $0x218] sm:$0xff]
                %259 = vst [vmem:[%s187 + $0x118] sm:$0xff] %v258
                %v260 = vld [vmem:[%s186 + $0x240] sm:$0xff]
                %261 = vst [vmem:[%s187 + $0x120] sm:$0xff] %v260
                %v262 = vld [vmem:[%s186 + $0x248] sm:$0xff]
                %263 = vst [vmem:[%s187 + $0x128] sm:$0xff] %v262
                %v264 = vld [vmem:[%s186 + $0x250] sm:$0xff]
                %265 = vst [vmem:[%s187 + $0x130] sm:$0xff] %v264
                %v266 = vld [vmem:[%s186 + $0x258] sm:$0xff]
                %267 = vst [vmem:[%s187 + $0x138] sm:$0xff] %v266
                %v268 = vld [vmem:[%s186 + $0x280] sm:$0xff]
                %269 = vst [vmem:[%s187 + $0x140] sm:$0xff] %v268
                %v270 = vld [vmem:[%s186 + $0x288] sm:$0xff]
                %271 = vst [vmem:[%s187 + $0x148] sm:$0xff] %v270
                %v272 = vld [vmem:[%s186 + $0x290] sm:$0xff]
                %273 = vst [vmem:[%s187 + $0x150] sm:$0xff] %v272
                %v274 = vld [vmem:[%s186 + $0x298] sm:$0xff]
                %275 = vst [vmem:[%s187 + $0x158] sm:$0xff] %v274
                %v276 = vld [vmem:[%s186 + $0x2c0] sm:$0xff]
                %277 = vst [vmem:[%s187 + $0x160] sm:$0xff] %v276
                %v278 = vld [vmem:[%s186 + $0x2c8] sm:$0xff]
                %279 = vst [vmem:[%s187 + $0x168] sm:$0xff] %v278
                %v280 = vld [vmem:[%s186 + $0x2d0] sm:$0xff]
                %281 = vst [vmem:[%s187 + $0x170] sm:$0xff] %v280
                %v282 = vld [vmem:[%s186 + $0x2d8] sm:$0xff]
                %283 = vst [vmem:[%s187 + $0x178] sm:$0xff] %v282
                %v284 = vld [vmem:[%s186 + $0x300] sm:$0xff]
                %285 = vst [vmem:[%s187 + $0x180] sm:$0xff] %v284
                %v286 = vld [vmem:[%s186 + $0x308] sm:$0xff]
                %287 = vst [vmem:[%s187 + $0x188] sm:$0xff] %v286
                %v288 = vld [vmem:[%s186 + $0x310] sm:$0xff]
                %289 = vst [vmem:[%s187 + $0x190] sm:$0xff] %v288
                %v290 = vld [vmem:[%s186 + $0x318] sm:$0xff]
                %291 = vst [vmem:[%s187 + $0x198] sm:$0xff] %v290
                %v292 = vld [vmem:[%s186 + $0x340] sm:$0xff]
                %293 = vst [vmem:[%s187 + $0x1a0] sm:$0xff] %v292
                %v294 = vld [vmem:[%s186 + $0x348] sm:$0xff]
                %295 = vst [vmem:[%s187 + $0x1a8] sm:$0xff] %v294
                %v296 = vld [vmem:[%s186 + $0x350] sm:$0xff]
                %297 = vst [vmem:[%s187 + $0x1b0] sm:$0xff] %v296
                %v298 = vld [vmem:[%s186 + $0x358] sm:$0xff]
                %299 = vst [vmem:[%s187 + $0x1b8] sm:$0xff] %v298
                %v300 = vld [vmem:[%s186 + $0x380] sm:$0xff]
                %301 = vst [vmem:[%s187 + $0x1c0] sm:$0xff] %v300
                %v302 = vld [vmem:[%s186 + $0x388] sm:$0xff]
                %303 = vst [vmem:[%s187 + $0x1c8] sm:$0xff] %v302
                %v304 = vld [vmem:[%s186 + $0x390] sm:$0xff]
                %305 = vst [vmem:[%s187 + $0x1d0] sm:$0xff] %v304
                %v306 = vld [vmem:[%s186 + $0x398] sm:$0xff]
                %307 = vst [vmem:[%s187 + $0x1d8] sm:$0xff] %v306
                %v308 = vld [vmem:[%s186 + $0x3c0] sm:$0xff]
                %309 = vst [vmem:[%s187 + $0x1e0] sm:$0xff] %v308
                %v310 = vld [vmem:[%s186 + $0x3c8] sm:$0xff]
                %311 = vst [vmem:[%s187 + $0x1e8] sm:$0xff] %v310
                %v312 = vld [vmem:[%s186 + $0x3d0] sm:$0xff]
                %313 = vst [vmem:[%s187 + $0x1f0] sm:$0xff] %v312
                %v314 = vld [vmem:[%s186 + $0x3d8] sm:$0xff]
                %315 = vst [vmem:[%s187 + $0x1f8] sm:$0xff] %v314
              $region37: #{fc1_forward.1} parent=31 // loop_footer
                %s185 = sadd.s32 1, %s181
              $region38: #{fc1_forward.1} parent=31 // loop_footer_branch
                %180 = sbr.rel target = $region34
              $region39: #{fc1_forward.1} parent=31 // loop_exit
                _
            $region32: #{fc1_forward.1} parent=27 // pred_fallthru
              _
            // Predicated region
            $region40: #{fc1_forward.1} parent=27 // pred_check
              _
            $region41: #{fc1_forward.1} parent=27 // pred_check_branch
              %317 = sbr.rel target = $region43
            $region42: #{fc1_forward.1} parent=27 // pred_region
              _
            $region43: #{fc1_forward.1} parent=27 // pred_fallthru
              _
          $region28: #{fc1_forward.1} parent=23 // pred_fallthru
            _
          %318 = vnop
        $region24: #{fc1_forward.1} parent=19 // pred_fallthru
          _
        // Predicated region
        $region44: #{fc1_forward.1} parent=19 // pred_check
          %p319 = pneg %p78
        $region45: #{fc1_forward.1} parent=19 // pred_check_branch
          %321 = sbr.rel (%p319) target = $region47
        $region46: #{fc1_forward.1} parent=19 // pred_region
          %s322 = smul.u32 64, %s18
          %p323 = scmp.lt.s32.totalorder %s322, 127
          %s324 = scalar_select %p323, %s322, 127
          %p325 = scmp.lt.s32.totalorder %s17, 0
          %s326 = scalar_select %p325, %s17, 0
          %s327 = sadd.s32 %s326, %s324
          %s328 = smul.addr %s327, 8
          %s329 = scalar_lea.vmem %s1, %s328
          %s330 = smul.u32 64, %s18
        $region47: #{fc1_forward.1} parent=19 // pred_fallthru
          _
      $region20: #{fc1_forward.1} parent=5 // pred_fallthru
        _
      %p331 = scmp.le.s32.totalorder 1, %s9
      %p332 = scmp.lt.s32.totalorder %s9, 5
      %p333 = pnand %p331, %p332
      %p334 = pneg %p333
      // Predicated region
      $region48: #{fc1_forward.1} parent=5 // pred_check
        _
      $region49: #{fc1_forward.1} parent=5 // pred_check_branch
        %336 = sbr.rel (%p333) target = $region51
      $region50: #{fc1_forward.1} parent=5 // pred_region
        %s337 = ssub.s32 %s9, 1
        %s338 = sand.u32 %s43, 1
        %s339 = sand.u32 %s43, 1
        %s340 = smul.addr %s339, 512
        %s341 = scalar_lea.vmem [#allocation3], %s340
        // Predicated region
        $region52: #{fc1_forward.1} parent=50 // pred_check
          %p342 = pneg %p56
        $region53: #{fc1_forward.1} parent=50 // pred_check_branch
          %344 = sbr.rel (%p342) target = $region55
        $region54: #{fc1_forward.1} parent=50 // pred_region
          _
        $region55: #{fc1_forward.1} parent=50 // pred_fallthru
          _
        %s345 = sand.u32 %s43, 1
        %s346 = sand.u32 %s43, 1
        %s347 = smul.addr %s346, 512
        %s348 = scalar_lea.vmem [#allocation3], %s347
        %p349 = pneg %p56
        %p350 = pneg %p53
        %s351 = smul.u32 64, %s21
        %p352 = scmp.lt.s32.totalorder %s351, 127
        %s353 = scalar_select %p352, %s351, 127
        %p354 = scmp.lt.s32.totalorder %s20, 0
        %s355 = scalar_select %p354, %s20, 0
        %s356 = sadd.s32 %s355, %s353
        %s357 = smul.addr %s356, 8
        %s358 = scalar_lea.vmem %s1, %s357
        %p359 = pneg %p84
        %p360 = pneg %p81
        %p361 = scmp.lt.s32.totalorder %s20, 0
        %s362 = scalar_select %p361, %s20, 0
        %s363 = scalar_lea.vmem %s2, %s362
        %p364 = pneg %p110
        %p365 = pneg %p107
        %p366 = pneg %p138
        %p367 = pneg %p135
        %s368 = smul.u32 16, %s19
        %p369 = scmp.lt.s32.totalorder %s368, 31
        %s370 = scalar_select %p369, %s368, 31
        %p371 = scmp.lt.s32.totalorder %s20, 0
        %s372 = scalar_select %p371, %s20, 0
        %s373 = sadd.s32 %s372, %s370
        %s374 = smul.addr %s373, 8
        %s375 = scalar_lea.vmem %s3, %s374
        %s376 = smul.u32 16, %s19
        %s377 = smul.u32 4, %s21
        %s378 = smul.u32 64, %s21
        %p379 = scmp.lt.s32.totalorder %s378, 127
        %s380 = scalar_select %p379, %s378, 127
        %p381 = scmp.lt.s32.totalorder %s20, 0
        %s382 = scalar_select %p381, %s20, 0
        %s383 = sadd.s32 %s382, %s380
        %s384 = smul.addr %s383, 8
        %s385 = scalar_lea.vmem %s1, %s384
        %s386 = smul.u32 64, %s21
        %p387 = scmp.lt.s32.totalorder %s20, 0
        %s388 = scalar_select %p387, %s20, 0
        %s389 = scalar_lea.vmem %s2, %s388
        %s390 = smul.u32 16, %s19
        %p391 = scmp.lt.s32.totalorder %s390, 31
        %s392 = scalar_select %p391, %s390, 31
        %p393 = scmp.lt.s32.totalorder %s20, 0
        %s394 = scalar_select %p393, %s20, 0
        %s395 = sadd.s32 %s394, %s392
        %s396 = smul.addr %s395, 8
        %s397 = scalar_lea.vmem %s3, %s396
        %s398 = smul.u32 16, %s19
        %p399 = scmp.eq.s32.totalorder %s21, 0
        // Predicated region
        $region56: #{fc1_forward.1} parent=50 // pred_check
          %p400 = pneg %p399
        $region57: #{fc1_forward.1} parent=50 // pred_check_branch
          %402 = sbr.rel (%p400) target = $region59
        $region58: #{fc1_forward.1} parent=50 // pred_region
          %403 = vst [vmem:[#allocation2] sm:$0xff] 0.0
          %404 = vst [vmem:[#allocation2 + $0x8] sm:$0xff] 0.0
          %405 = vst [vmem:[#allocation2 + $0x10] sm:$0xff] 0.0
          %406 = vst [vmem:[#allocation2 + $0x18] sm:$0xff] 0.0
          %407 = vst [vmem:[#allocation2 + $0x20] sm:$0xff] 0.0
          %408 = vst [vmem:[#allocation2 + $0x28] sm:$0xff] 0.0
          %409 = vst [vmem:[#allocation2 + $0x30] sm:$0xff] 0.0
          %410 = vst [vmem:[#allocation2 + $0x38] sm:$0xff] 0.0
          %411 = vst [vmem:[#allocation2 + $0x40] sm:$0xff] 0.0
          %412 = vst [vmem:[#allocation2 + $0x48] sm:$0xff] 0.0
          %413 = vst [vmem:[#allocation2 + $0x50] sm:$0xff] 0.0
          %414 = vst [vmem:[#allocation2 + $0x58] sm:$0xff] 0.0
          %415 = vst [vmem:[#allocation2 + $0x60] sm:$0xff] 0.0
          %416 = vst [vmem:[#allocation2 + $0x68] sm:$0xff] 0.0
          %417 = vst [vmem:[#allocation2 + $0x70] sm:$0xff] 0.0
          %418 = vst [vmem:[#allocation2 + $0x78] sm:$0xff] 0.0
        $region59: #{fc1_forward.1} parent=50 // pred_fallthru
          _
        %v419 = vld [vmem:[#allocation2] sm:$0xff]
        %v420 = vld [vmem:[#allocation2 + $0x8] sm:$0xff]
        %v421 = vld [vmem:[#allocation2 + $0x10] sm:$0xff]
        %v422 = vld [vmem:[#allocation2 + $0x18] sm:$0xff]
        %v423 = vld [vmem:[#allocation2 + $0x20] sm:$0xff]
        %v424 = vld [vmem:[#allocation2 + $0x28] sm:$0xff]
        %v425 = vld [vmem:[#allocation2 + $0x30] sm:$0xff]
        %v426 = vld [vmem:[#allocation2 + $0x38] sm:$0xff]
        %v427 = vld [vmem:[#allocation2 + $0x40] sm:$0xff]
        %v428 = vld [vmem:[#allocation2 + $0x48] sm:$0xff]
        %v429 = vld [vmem:[#allocation2 + $0x50] sm:$0xff]
        %v430 = vld [vmem:[#allocation2 + $0x58] sm:$0xff]
        %v431 = vld [vmem:[#allocation2 + $0x60] sm:$0xff]
        %v432 = vld [vmem:[#allocation2 + $0x68] sm:$0xff]
        %v433 = vld [vmem:[#allocation2 + $0x70] sm:$0xff]
        %v434 = vld [vmem:[#allocation2 + $0x78] sm:$0xff]
        %v435 = vld [vmem:[%s341] sm:$0xff]
        %v436 = vld [vmem:[%s341 + $0x8] sm:$0xff]
        %v437 = vld [vmem:[%s341 + $0x10] sm:$0xff]
        %v438 = vld [vmem:[%s341 + $0x18] sm:$0xff]
        %v439 = vld [vmem:[%s341 + $0x20] sm:$0xff]
        %v440 = vld [vmem:[%s341 + $0x28] sm:$0xff]
        %v441 = vld [vmem:[%s341 + $0x30] sm:$0xff]
        %v442 = vld [vmem:[%s341 + $0x38] sm:$0xff]
        %v443 = vld [vmem:[%s341 + $0x40] sm:$0xff]
        %v444 = vld [vmem:[%s341 + $0x48] sm:$0xff]
        %v445 = vld [vmem:[%s341 + $0x50] sm:$0xff]
        %v446 = vld [vmem:[%s341 + $0x58] sm:$0xff]
        %v447 = vld [vmem:[%s341 + $0x60] sm:$0xff]
        %v448 = vld [vmem:[%s341 + $0x68] sm:$0xff]
        %v449 = vld [vmem:[%s341 + $0x70] sm:$0xff]
        %v450 = vld [vmem:[%s341 + $0x78] sm:$0xff]
        %v451 = vld [vmem:[%s341 + $0x80] sm:$0xff]
        %v452 = vld [vmem:[%s341 + $0x88] sm:$0xff]
        %v453 = vld [vmem:[%s341 + $0x90] sm:$0xff]
        %v454 = vld [vmem:[%s341 + $0x98] sm:$0xff]
        %v455 = vld [vmem:[%s341 + $0xa0] sm:$0xff]
        %v456 = vld [vmem:[%s341 + $0xa8] sm:$0xff]
        %v457 = vld [vmem:[%s341 + $0xb0] sm:$0xff]
        %v458 = vld [vmem:[%s341 + $0xb8] sm:$0xff]
        %v459 = vld [vmem:[%s341 + $0xc0] sm:$0xff]
        %v460 = vld [vmem:[%s341 + $0xc8] sm:$0xff]
        %v461 = vld [vmem:[%s341 + $0xd0] sm:$0xff]
        %v462 = vld [vmem:[%s341 + $0xd8] sm:$0xff]
        %v463 = vld [vmem:[%s341 + $0xe0] sm:$0xff]
        %v464 = vld [vmem:[%s341 + $0xe8] sm:$0xff]
        %v465 = vld [vmem:[%s341 + $0xf0] sm:$0xff]
        %v466 = vld [vmem:[%s341 + $0xf8] sm:$0xff]
        %v467 = vld [vmem:[%s341 + $0x100] sm:$0xff]
        %v468 = vld [vmem:[%s341 + $0x108] sm:$0xff]
        %v469 = vld [vmem:[%s341 + $0x110] sm:$0xff]
        %v470 = vld [vmem:[%s341 + $0x118] sm:$0xff]
        %v471 = vld [vmem:[%s341 + $0x120] sm:$0xff]
        %v472 = vld [vmem:[%s341 + $0x128] sm:$0xff]
        %v473 = vld [vmem:[%s341 + $0x130] sm:$0xff]
        %v474 = vld [vmem:[%s341 + $0x138] sm:$0xff]
        %v475 = vld [vmem:[%s341 + $0x140] sm:$0xff]
        %v476 = vld [vmem:[%s341 + $0x148] sm:$0xff]
        %v477 = vld [vmem:[%s341 + $0x150] sm:$0xff]
        %v478 = vld [vmem:[%s341 + $0x158] sm:$0xff]
        %v479 = vld [vmem:[%s341 + $0x160] sm:$0xff]
        %v480 = vld [vmem:[%s341 + $0x168] sm:$0xff]
        %v481 = vld [vmem:[%s341 + $0x170] sm:$0xff]
        %v482 = vld [vmem:[%s341 + $0x178] sm:$0xff]
        %v483 = vld [vmem:[%s341 + $0x180] sm:$0xff]
        %v484 = vld [vmem:[%s341 + $0x188] sm:$0xff]
        %v485 = vld [vmem:[%s341 + $0x190] sm:$0xff]
        %v486 = vld [vmem:[%s341 + $0x198] sm:$0xff]
        %v487 = vld [vmem:[%s341 + $0x1a0] sm:$0xff]
        %v488 = vld [vmem:[%s341 + $0x1a8] sm:$0xff]
        %v489 = vld [vmem:[%s341 + $0x1b0] sm:$0xff]
        %v490 = vld [vmem:[%s341 + $0x1b8] sm:$0xff]
        %v491 = vld [vmem:[%s341 + $0x1c0] sm:$0xff]
        %v492 = vld [vmem:[%s341 + $0x1c8] sm:$0xff]
        %v493 = vld [vmem:[%s341 + $0x1d0] sm:$0xff]
        %v494 = vld [vmem:[%s341 + $0x1d8] sm:$0xff]
        %v495 = vld [vmem:[%s341 + $0x1e0] sm:$0xff]
        %v496 = vld [vmem:[%s341 + $0x1e8] sm:$0xff]
        %v497 = vld [vmem:[%s341 + $0x1f0] sm:$0xff]
        %v498 = vld [vmem:[%s341 + $0x1f8] sm:$0xff]
        %v499 = vld [vmem:[%s385] sm:$0xff]
        %v500 = vld [vmem:[%s385 + $0x8] sm:$0xff]
        %v501 = vld [vmem:[%s385 + $0x10] sm:$0xff]
        %v502 = vld [vmem:[%s385 + $0x18] sm:$0xff]
        %v503 = vld [vmem:[%s385 + $0x20] sm:$0xff]
        %v504 = vld [vmem:[%s385 + $0x28] sm:$0xff]
        %v505 = vld [vmem:[%s385 + $0x30] sm:$0xff]
        %v506 = vld [vmem:[%s385 + $0x38] sm:$0xff]
        %v507 = vld [vmem:[%s385 + $0x40] sm:$0xff]
        %v508 = vld [vmem:[%s385 + $0x48] sm:$0xff]
        %v509 = vld [vmem:[%s385 + $0x50] sm:$0xff]
        %v510 = vld [vmem:[%s385 + $0x58] sm:$0xff]
        %v511 = vld [vmem:[%s385 + $0x60] sm:$0xff]
        %v512 = vld [vmem:[%s385 + $0x68] sm:$0xff]
        %v513 = vld [vmem:[%s385 + $0x70] sm:$0xff]
        %v514 = vld [vmem:[%s385 + $0x78] sm:$0xff]
        %v515 = vld [vmem:[%s385 + $0x80] sm:$0xff]
        %v516 = vld [vmem:[%s385 + $0x88] sm:$0xff]
        %v517 = vld [vmem:[%s385 + $0x90] sm:$0xff]
        %v518 = vld [vmem:[%s385 + $0x98] sm:$0xff]
        %v519 = vld [vmem:[%s385 + $0xa0] sm:$0xff]
        %v520 = vld [vmem:[%s385 + $0xa8] sm:$0xff]
        %v521 = vld [vmem:[%s385 + $0xb0] sm:$0xff]
        %v522 = vld [vmem:[%s385 + $0xb8] sm:$0xff]
        %v523 = vld [vmem:[%s385 + $0xc0] sm:$0xff]
        %v524 = vld [vmem:[%s385 + $0xc8] sm:$0xff]
        %v525 = vld [vmem:[%s385 + $0xd0] sm:$0xff]
        %v526 = vld [vmem:[%s385 + $0xd8] sm:$0xff]
        %v527 = vld [vmem:[%s385 + $0xe0] sm:$0xff]
        %v528 = vld [vmem:[%s385 + $0xe8] sm:$0xff]
        %v529 = vld [vmem:[%s385 + $0xf0] sm:$0xff]
        %v530 = vld [vmem:[%s385 + $0xf8] sm:$0xff]
        %v531 = vld [vmem:[%s385 + $0x100] sm:$0xff]
        %v532 = vld [vmem:[%s385 + $0x108] sm:$0xff]
        %v533 = vld [vmem:[%s385 + $0x110] sm:$0xff]
        %v534 = vld [vmem:[%s385 + $0x118] sm:$0xff]
        %v535 = vld [vmem:[%s385 + $0x120] sm:$0xff]
        %v536 = vld [vmem:[%s385 + $0x128] sm:$0xff]
        %v537 = vld [vmem:[%s385 + $0x130] sm:$0xff]
        %v538 = vld [vmem:[%s385 + $0x138] sm:$0xff]
        %v539 = vld [vmem:[%s385 + $0x140] sm:$0xff]
        %v540 = vld [vmem:[%s385 + $0x148] sm:$0xff]
        %v541 = vld [vmem:[%s385 + $0x150] sm:$0xff]
        %v542 = vld [vmem:[%s385 + $0x158] sm:$0xff]
        %v543 = vld [vmem:[%s385 + $0x160] sm:$0xff]
        %v544 = vld [vmem:[%s385 + $0x168] sm:$0xff]
        %v545 = vld [vmem:[%s385 + $0x170] sm:$0xff]
        %v546 = vld [vmem:[%s385 + $0x178] sm:$0xff]
        %v547 = vld [vmem:[%s385 + $0x180] sm:$0xff]
        %v548 = vld [vmem:[%s385 + $0x188] sm:$0xff]
        %v549 = vld [vmem:[%s385 + $0x190] sm:$0xff]
        %v550 = vld [vmem:[%s385 + $0x198] sm:$0xff]
        %v551 = vld [vmem:[%s385 + $0x1a0] sm:$0xff]
        %v552 = vld [vmem:[%s385 + $0x1a8] sm:$0xff]
        %v553 = vld [vmem:[%s385 + $0x1b0] sm:$0xff]
        %v554 = vld [vmem:[%s385 + $0x1b8] sm:$0xff]
        %v555 = vld [vmem:[%s385 + $0x1c0] sm:$0xff]
        %v556 = vld [vmem:[%s385 + $0x1c8] sm:$0xff]
        %v557 = vld [vmem:[%s385 + $0x1d0] sm:$0xff]
        %v558 = vld [vmem:[%s385 + $0x1d8] sm:$0xff]
        %v559 = vld [vmem:[%s385 + $0x1e0] sm:$0xff]
        %v560 = vld [vmem:[%s385 + $0x1e8] sm:$0xff]
        %v561 = vld [vmem:[%s385 + $0x1f0] sm:$0xff]
        %v562 = vld [vmem:[%s385 + $0x1f8] sm:$0xff]
        %563 = vmatprep.subr.mxu0 0.0
        %564 = vmatpush1.msra.mxu0 %v514
        %565 = vmatprep.subr.mxu0 0.0
        %566 = vmatpush1.msra.mxu0 %v513
        %567 = vmatprep.subr.mxu0 0.0
        %568 = vmatpush1.msra.mxu0 %v512
        %569 = vmatprep.subr.mxu0 0.0
        %570 = vmatpush1.msra.mxu0 %v511
        %571 = vmatprep.subr.mxu0 0.0
        %572 = vmatpush1.msra.mxu0 %v510
        %573 = vmatprep.subr.mxu0 0.0
        %574 = vmatpush1.msra.mxu0 %v509
        %575 = vmatprep.subr.mxu0 0.0
        %576 = vmatpush1.msra.mxu0 %v508
        %577 = vmatprep.subr.mxu0 0.0
        %578 = vmatpush1.msra.mxu0 %v507
        %579 = vmatprep.subr.mxu0 0.0
        %580 = vmatpush1.msra.mxu0 %v506
        %581 = vmatprep.subr.mxu0 0.0
        %582 = vmatpush1.msra.mxu0 %v505
        %583 = vmatprep.subr.mxu0 0.0
        %584 = vmatpush1.msra.mxu0 %v504
        %585 = vmatprep.subr.mxu0 0.0
        %586 = vmatpush1.msra.mxu0 %v503
        %587 = vmatprep.subr.mxu0 0.0
        %588 = vmatpush1.msra.mxu0 %v502
        %589 = vmatprep.subr.mxu0 0.0
        %590 = vmatpush1.msra.mxu0 %v501
        %591 = vmatprep.subr.mxu0 0.0
        %592 = vmatpush1.msra.mxu0 %v500
        %593 = vmatprep.subr.mxu0 0.0
        %594 = vmatpush1.msra.mxu0 %v499
        %595 = vmatprep.subr.mxu0 0.0
        %596 = vmatpush2.msra.mxu0 %v530
        %597 = vmatprep.subr.mxu0 0.0
        %598 = vmatpush2.msra.mxu0 %v529
        %599 = vmatprep.subr.mxu0 0.0
        %600 = vmatpush2.msra.mxu0 %v528
        %601 = vmatprep.subr.mxu0 0.0
        %602 = vmatpush2.msra.mxu0 %v527
        %603 = vmatprep.subr.mxu0 0.0
        %604 = vmatpush2.msra.mxu0 %v526
        %605 = vmatprep.subr.mxu0 0.0
        %606 = vmatpush2.msra.mxu0 %v525
        %607 = vmatprep.subr.mxu0 0.0
        %608 = vmatpush2.msra.mxu0 %v524
        %609 = vmatprep.subr.mxu0 0.0
        %610 = vmatpush2.msra.mxu0 %v523
        %611 = vmatprep.subr.mxu0 0.0
        %612 = vmatpush2.msra.mxu0 %v522
        %613 = vmatprep.subr.mxu0 0.0
        %614 = vmatpush2.msra.mxu0 %v521
        %615 = vmatprep.subr.mxu0 0.0
        %616 = vmatpush2.msra.mxu0 %v520
        %617 = vmatprep.subr.mxu0 0.0
        %618 = vmatpush2.msra.mxu0 %v519
        %619 = vmatprep.subr.mxu0 0.0
        %620 = vmatpush2.msra.mxu0 %v518
        %621 = vmatprep.subr.mxu0 0.0
        %622 = vmatpush2.msra.mxu0 %v517
        %623 = vmatprep.subr.mxu0 0.0
        %624 = vmatpush2.msra.mxu0 %v516
        %625 = vmatprep.subr.mxu0 0.0
        %626 = vmatpush2.msra.mxu0 %v515
        %627 = vmatprep.mubr.f32.mxu0 %v436
        %628 = vmatmul.mubr.f32.gmra.mxu0 %v435
        %v629 = vpop.f32.mrf.mxu0
        %v630 = vadd.f32 0.0, %v629
        %v631 = vpop.f32.mrf.mxu0
        %632 = vmatprep.mubr.f32.mxu0 %v440
        %633 = vmatmul.mubr.f32.gmra.mxu0 %v439
        %v634 = vpop.f32.mrf.mxu0
        %v635 = vadd.f32 0.0, %v634
        %v636 = vpop.f32.mrf.mxu0
        %637 = vmatprep.mubr.f32.mxu0 %v444
        %638 = vmatmul.mubr.f32.gmra.mxu0 %v443
        %v639 = vpop.f32.mrf.mxu0
        %v640 = vadd.f32 0.0, %v639
        %v641 = vpop.f32.mrf.mxu0
        %642 = vmatprep.mubr.f32.mxu0 %v448
        %643 = vmatmul.mubr.f32.gmra.mxu0 %v447
        %v644 = vpop.f32.mrf.mxu0
        %v645 = vadd.f32 0.0, %v644
        %v646 = vpop.f32.mrf.mxu0
        %647 = vmatprep.mubr.f32.mxu0 %v452
        %648 = vmatmul.mubr.f32.gmra.mxu0 %v451
        %v649 = vpop.f32.mrf.mxu0
        %v650 = vadd.f32 0.0, %v649
        %v651 = vpop.f32.mrf.mxu0
        %652 = vmatprep.mubr.f32.mxu0 %v456
        %653 = vmatmul.mubr.f32.gmra.mxu0 %v455
        %v654 = vpop.f32.mrf.mxu0
        %v655 = vadd.f32 0.0, %v654
        %v656 = vpop.f32.mrf.mxu0
        %657 = vmatprep.mubr.f32.mxu0 %v460
        %658 = vmatmul.mubr.f32.gmra.mxu0 %v459
        %v659 = vpop.f32.mrf.mxu0
        %v660 = vadd.f32 0.0, %v659
        %v661 = vpop.f32.mrf.mxu0
        %662 = vmatprep.mubr.f32.mxu0 %v464
        %663 = vmatmul.mubr.f32.gmra.mxu0 %v463
        %v664 = vpop.f32.mrf.mxu0
        %v665 = vadd.f32 0.0, %v664
        %v666 = vpop.f32.mrf.mxu0
        %667 = vmatprep.mubr.f32.mxu0 %v468
        %668 = vmatmul.mubr.f32.gmra.mxu0 %v467
        %v669 = vpop.f32.mrf.mxu0
        %v670 = vadd.f32 0.0, %v669
        %v671 = vpop.f32.mrf.mxu0
        %672 = vmatprep.mubr.f32.mxu0 %v472
        %673 = vmatmul.mubr.f32.gmra.mxu0 %v471
        %v674 = vpop.f32.mrf.mxu0
        %v675 = vadd.f32 0.0, %v674
        %v676 = vpop.f32.mrf.mxu0
        %677 = vmatprep.mubr.f32.mxu0 %v476
        %678 = vmatmul.mubr.f32.gmra.mxu0 %v475
        %v679 = vpop.f32.mrf.mxu0
        %v680 = vadd.f32 0.0, %v679
        %v681 = vpop.f32.mrf.mxu0
        %682 = vmatprep.mubr.f32.mxu0 %v480
        %683 = vmatmul.mubr.f32.gmra.mxu0 %v479
        %v684 = vpop.f32.mrf.mxu0
        %v685 = vadd.f32 0.0, %v684
        %v686 = vpop.f32.mrf.mxu0
        %687 = vmatprep.mubr.f32.mxu0 %v484
        %688 = vmatmul.mubr.f32.gmra.mxu0 %v483
        %v689 = vpop.f32.mrf.mxu0
        %v690 = vadd.f32 0.0, %v689
        %v691 = vpop.f32.mrf.mxu0
        %692 = vmatprep.mubr.f32.mxu0 %v488
        %693 = vmatmul.mubr.f32.gmra.mxu0 %v487
        %v694 = vpop.f32.mrf.mxu0
        %v695 = vadd.f32 0.0, %v694
        %v696 = vpop.f32.mrf.mxu0
        %697 = vmatprep.mubr.f32.mxu0 %v492
        %698 = vmatmul.mubr.f32.gmra.mxu0 %v491
        %v699 = vpop.f32.mrf.mxu0
        %v700 = vadd.f32 0.0, %v699
        %v701 = vpop.f32.mrf.mxu0
        %702 = vmatprep.mubr.f32.mxu0 %v496
        %703 = vmatmul.mubr.f32.gmra.mxu0 %v495
        %v704 = vpop.f32.mrf.mxu0
        %v705 = vadd.f32 0.0, %v704
        %v706 = vpop.f32.mrf.mxu0
        %707 = vdwg.mxu0
        %708 = vmatprep.subr.mxu0 0.0
        %709 = vmatpush1.msra.mxu0 %v546
        %710 = vmatprep.subr.mxu0 0.0
        %711 = vmatpush1.msra.mxu0 %v545
        %712 = vmatprep.subr.mxu0 0.0
        %713 = vmatpush1.msra.mxu0 %v544
        %714 = vmatprep.subr.mxu0 0.0
        %715 = vmatpush1.msra.mxu0 %v543
        %716 = vmatprep.subr.mxu0 0.0
        %717 = vmatpush1.msra.mxu0 %v542
        %718 = vmatprep.subr.mxu0 0.0
        %719 = vmatpush1.msra.mxu0 %v541
        %720 = vmatprep.subr.mxu0 0.0
        %721 = vmatpush1.msra.mxu0 %v540
        %722 = vmatprep.subr.mxu0 0.0
        %723 = vmatpush1.msra.mxu0 %v539
        %724 = vmatprep.subr.mxu0 0.0
        %725 = vmatpush1.msra.mxu0 %v538
        %726 = vmatprep.subr.mxu0 0.0
        %727 = vmatpush1.msra.mxu0 %v537
        %728 = vmatprep.subr.mxu0 0.0
        %729 = vmatpush1.msra.mxu0 %v536
        %730 = vmatprep.subr.mxu0 0.0
        %731 = vmatpush1.msra.mxu0 %v535
        %732 = vmatprep.subr.mxu0 0.0
        %733 = vmatpush1.msra.mxu0 %v534
        %734 = vmatprep.subr.mxu0 0.0
        %735 = vmatpush1.msra.mxu0 %v533
        %736 = vmatprep.subr.mxu0 0.0
        %737 = vmatpush1.msra.mxu0 %v532
        %738 = vmatprep.subr.mxu0 0.0
        %739 = vmatpush1.msra.mxu0 %v531
        %740 = vmatprep.subr.mxu0 0.0
        %741 = vmatpush2.msra.mxu0 %v562
        %742 = vmatprep.subr.mxu0 0.0
        %743 = vmatpush2.msra.mxu0 %v561
        %744 = vmatprep.subr.mxu0 0.0
        %745 = vmatpush2.msra.mxu0 %v560
        %746 = vmatprep.subr.mxu0 0.0
        %747 = vmatpush2.msra.mxu0 %v559
        %748 = vmatprep.subr.mxu0 0.0
        %749 = vmatpush2.msra.mxu0 %v558
        %750 = vmatprep.subr.mxu0 0.0
        %751 = vmatpush2.msra.mxu0 %v557
        %752 = vmatprep.subr.mxu0 0.0
        %753 = vmatpush2.msra.mxu0 %v556
        %754 = vmatprep.subr.mxu0 0.0
        %755 = vmatpush2.msra.mxu0 %v555
        %756 = vmatprep.subr.mxu0 0.0
        %757 = vmatpush2.msra.mxu0 %v554
        %758 = vmatprep.subr.mxu0 0.0
        %759 = vmatpush2.msra.mxu0 %v553
        %760 = vmatprep.subr.mxu0 0.0
        %761 = vmatpush2.msra.mxu0 %v552
        %762 = vmatprep.subr.mxu0 0.0
        %763 = vmatpush2.msra.mxu0 %v551
        %764 = vmatprep.subr.mxu0 0.0
        %765 = vmatpush2.msra.mxu0 %v550
        %766 = vmatprep.subr.mxu0 0.0
        %767 = vmatpush2.msra.mxu0 %v549
        %768 = vmatprep.subr.mxu0 0.0
        %769 = vmatpush2.msra.mxu0 %v548
        %770 = vmatprep.subr.mxu0 0.0
        %771 = vmatpush2.msra.mxu0 %v547
        %772 = vmatprep.mubr.f32.mxu0 %v438
        %773 = vmatmul.mubr.f32.gmra.mxu0 %v437
        %v774 = vpop.f32.mrf.mxu0
        %v775 = vadd.f32 %v630, %v774
        %v776 = vpop.f32.mrf.mxu0
        %777 = vmatprep.mubr.f32.mxu0 %v442
        %778 = vmatmul.mubr.f32.gmra.mxu0 %v441
        %v779 = vpop.f32.mrf.mxu0
        %v780 = vadd.f32 %v635, %v779
        %v781 = vpop.f32.mrf.mxu0
        %782 = vmatprep.mubr.f32.mxu0 %v446
        %783 = vmatmul.mubr.f32.gmra.mxu0 %v445
        %v784 = vpop.f32.mrf.mxu0
        %v785 = vadd.f32 %v640, %v784
        %v786 = vpop.f32.mrf.mxu0
        %787 = vmatprep.mubr.f32.mxu0 %v450
        %788 = vmatmul.mubr.f32.gmra.mxu0 %v449
        %v789 = vpop.f32.mrf.mxu0
        %v790 = vadd.f32 %v645, %v789
        %v791 = vpop.f32.mrf.mxu0
        %792 = vmatprep.mubr.f32.mxu0 %v454
        %793 = vmatmul.mubr.f32.gmra.mxu0 %v453
        %v794 = vpop.f32.mrf.mxu0
        %v795 = vadd.f32 %v650, %v794
        %v796 = vpop.f32.mrf.mxu0
        %797 = vmatprep.mubr.f32.mxu0 %v458
        %798 = vmatmul.mubr.f32.gmra.mxu0 %v457
        %v799 = vpop.f32.mrf.mxu0
        %v800 = vadd.f32 %v655, %v799
        %v801 = vpop.f32.mrf.mxu0
        %802 = vmatprep.mubr.f32.mxu0 %v462
        %803 = vmatmul.mubr.f32.gmra.mxu0 %v461
        %v804 = vpop.f32.mrf.mxu0
        %v805 = vadd.f32 %v660, %v804
        %v806 = vpop.f32.mrf.mxu0
        %807 = vmatprep.mubr.f32.mxu0 %v466
        %808 = vmatmul.mubr.f32.gmra.mxu0 %v465
        %v809 = vpop.f32.mrf.mxu0
        %v810 = vadd.f32 %v665, %v809
        %v811 = vpop.f32.mrf.mxu0
        %812 = vmatprep.mubr.f32.mxu0 %v470
        %813 = vmatmul.mubr.f32.gmra.mxu0 %v469
        %v814 = vpop.f32.mrf.mxu0
        %v815 = vadd.f32 %v670, %v814
        %v816 = vpop.f32.mrf.mxu0
        %817 = vmatprep.mubr.f32.mxu0 %v474
        %818 = vmatmul.mubr.f32.gmra.mxu0 %v473
        %v819 = vpop.f32.mrf.mxu0
        %v820 = vadd.f32 %v675, %v819
        %v821 = vpop.f32.mrf.mxu0
        %822 = vmatprep.mubr.f32.mxu0 %v478
        %823 = vmatmul.mubr.f32.gmra.mxu0 %v477
        %v824 = vpop.f32.mrf.mxu0
        %v825 = vadd.f32 %v680, %v824
        %v826 = vpop.f32.mrf.mxu0
        %827 = vmatprep.mubr.f32.mxu0 %v482
        %828 = vmatmul.mubr.f32.gmra.mxu0 %v481
        %v829 = vpop.f32.mrf.mxu0
        %v830 = vadd.f32 %v685, %v829
        %v831 = vpop.f32.mrf.mxu0
        %832 = vmatprep.mubr.f32.mxu0 %v486
        %833 = vmatmul.mubr.f32.gmra.mxu0 %v485
        %v834 = vpop.f32.mrf.mxu0
        %v835 = vadd.f32 %v690, %v834
        %v836 = vpop.f32.mrf.mxu0
        %837 = vmatprep.mubr.f32.mxu0 %v490
        %838 = vmatmul.mubr.f32.gmra.mxu0 %v489
        %v839 = vpop.f32.mrf.mxu0
        %v840 = vadd.f32 %v695, %v839
        %v841 = vpop.f32.mrf.mxu0
        %842 = vmatprep.mubr.f32.mxu0 %v494
        %843 = vmatmul.mubr.f32.gmra.mxu0 %v493
        %v844 = vpop.f32.mrf.mxu0
        %v845 = vadd.f32 %v700, %v844
        %v846 = vpop.f32.mrf.mxu0
        %847 = vmatprep.mubr.f32.mxu0 %v498
        %848 = vmatmul.mubr.f32.gmra.mxu0 %v497
        %v849 = vpop.f32.mrf.mxu0
        %v850 = vadd.f32 %v705, %v849
        %v851 = vpop.f32.mrf.mxu0
        %852 = vdwg.mxu0
        %v853 = vadd.f32 %v419, %v775
        %v854 = vadd.f32 %v420, %v780
        %v855 = vadd.f32 %v421, %v785
        %v856 = vadd.f32 %v422, %v790
        %v857 = vadd.f32 %v423, %v795
        %v858 = vadd.f32 %v424, %v800
        %v859 = vadd.f32 %v425, %v805
        %v860 = vadd.f32 %v426, %v810
        %v861 = vadd.f32 %v427, %v815
        %v862 = vadd.f32 %v428, %v820
        %v863 = vadd.f32 %v429, %v825
        %v864 = vadd.f32 %v430, %v830
        %v865 = vadd.f32 %v431, %v835
        %v866 = vadd.f32 %v432, %v840
        %v867 = vadd.f32 %v433, %v845
        %v868 = vadd.f32 %v434, %v850
        %869 = vst [vmem:[#allocation2] sm:$0xff] %v853
        %870 = vst [vmem:[#allocation2 + $0x8] sm:$0xff] %v854
        %871 = vst [vmem:[#allocation2 + $0x10] sm:$0xff] %v855
        %872 = vst [vmem:[#allocation2 + $0x18] sm:$0xff] %v856
        %873 = vst [vmem:[#allocation2 + $0x20] sm:$0xff] %v857
        %874 = vst [vmem:[#allocation2 + $0x28] sm:$0xff] %v858
        %875 = vst [vmem:[#allocation2 + $0x30] sm:$0xff] %v859
        %876 = vst [vmem:[#allocation2 + $0x38] sm:$0xff] %v860
        %877 = vst [vmem:[#allocation2 + $0x40] sm:$0xff] %v861
        %878 = vst [vmem:[#allocation2 + $0x48] sm:$0xff] %v862
        %879 = vst [vmem:[#allocation2 + $0x50] sm:$0xff] %v863
        %880 = vst [vmem:[#allocation2 + $0x58] sm:$0xff] %v864
        %881 = vst [vmem:[#allocation2 + $0x60] sm:$0xff] %v865
        %882 = vst [vmem:[#allocation2 + $0x68] sm:$0xff] %v866
        %883 = vst [vmem:[#allocation2 + $0x70] sm:$0xff] %v867
        %884 = vst [vmem:[#allocation2 + $0x78] sm:$0xff] %v868
        %p885 = scmp.eq.s32.totalorder %s21, 1
        // Predicated region
        $region60: #{fc1_forward.1} parent=50 // pred_check
          %p886 = pneg %p885
        $region61: #{fc1_forward.1} parent=50 // pred_check_branch
          %888 = sbr.rel (%p886) target = $region63
        $region62: #{fc1_forward.1} parent=50 // pred_region
          %v889 = vld [vmem:[#allocation2] sm:$0xff]
          %v890 = vld [vmem:[#allocation2 + $0x8] sm:$0xff]
          %v891 = vld [vmem:[#allocation2 + $0x10] sm:$0xff]
          %v892 = vld [vmem:[#allocation2 + $0x18] sm:$0xff]
          %v893 = vld [vmem:[#allocation2 + $0x20] sm:$0xff]
          %v894 = vld [vmem:[#allocation2 + $0x28] sm:$0xff]
          %v895 = vld [vmem:[#allocation2 + $0x30] sm:$0xff]
          %v896 = vld [vmem:[#allocation2 + $0x38] sm:$0xff]
          %v897 = vld [vmem:[#allocation2 + $0x40] sm:$0xff]
          %v898 = vld [vmem:[#allocation2 + $0x48] sm:$0xff]
          %v899 = vld [vmem:[#allocation2 + $0x50] sm:$0xff]
          %v900 = vld [vmem:[#allocation2 + $0x58] sm:$0xff]
          %v901 = vld [vmem:[#allocation2 + $0x60] sm:$0xff]
          %v902 = vld [vmem:[#allocation2 + $0x68] sm:$0xff]
          %v903 = vld [vmem:[#allocation2 + $0x70] sm:$0xff]
          %v904 = vld [vmem:[#allocation2 + $0x78] sm:$0xff]
          %v905 = vld [vmem:[%s389] sm:$0x1]
          %v907 = vlaneseq
          %v908 = vshrl.u32 %v907, 7
          %v909 = vsub.s32 0, %v908
          %v910 = vrot.slane %v905, %v909
          %v912 = vadd.f32 %v889, %v910
          %v913 = vadd.f32 %v890, %v910
          %v914 = vadd.f32 %v891, %v910
          %v915 = vadd.f32 %v892, %v910
          %v916 = vadd.f32 %v893, %v910
          %v917 = vadd.f32 %v894, %v910
          %v918 = vadd.f32 %v895, %v910
          %v919 = vadd.f32 %v896, %v910
          %v920 = vadd.f32 %v897, %v910
          %v921 = vadd.f32 %v898, %v910
          %v922 = vadd.f32 %v899, %v910
          %v923 = vadd.f32 %v900, %v910
          %v924 = vadd.f32 %v901, %v910
          %v925 = vadd.f32 %v902, %v910
          %v926 = vadd.f32 %v903, %v910
          %v927 = vadd.f32 %v904, %v910
          %928 = vst [vmem:[%s397] sm:$0xff] %v912
          %929 = vst [vmem:[%s397 + $0x8] sm:$0xff] %v913
          %930 = vst [vmem:[%s397 + $0x10] sm:$0xff] %v914
          %931 = vst [vmem:[%s397 + $0x18] sm:$0xff] %v915
          %932 = vst [vmem:[%s397 + $0x20] sm:$0xff] %v916
          %933 = vst [vmem:[%s397 + $0x28] sm:$0xff] %v917
          %934 = vst [vmem:[%s397 + $0x30] sm:$0xff] %v918
          %935 = vst [vmem:[%s397 + $0x38] sm:$0xff] %v919
          %936 = vst [vmem:[%s397 + $0x40] sm:$0xff] %v920
          %937 = vst [vmem:[%s397 + $0x48] sm:$0xff] %v921
          %938 = vst [vmem:[%s397 + $0x50] sm:$0xff] %v922
          %939 = vst [vmem:[%s397 + $0x58] sm:$0xff] %v923
          %940 = vst [vmem:[%s397 + $0x60] sm:$0xff] %v924
          %941 = vst [vmem:[%s397 + $0x68] sm:$0xff] %v925
          %942 = vst [vmem:[%s397 + $0x70] sm:$0xff] %v926
          %943 = vst [vmem:[%s397 + $0x78] sm:$0xff] %v927
        $region63: #{fc1_forward.1} parent=50 // pred_fallthru
          _
        %s944 = smul.u32 16, %s19
        %p945 = scmp.lt.s32.totalorder %s944, 31
        %s946 = scalar_select %p945, %s944, 31
        %p947 = scmp.lt.s32.totalorder %s20, 0
        %s948 = scalar_select %p947, %s20, 0
        %s949 = sadd.s32 %s948, %s946
        %s950 = smul.addr %s949, 8
        %s951 = scalar_lea.vmem %s3, %s950
        // Predicated region
        $region64: #{fc1_forward.1} parent=50 // pred_check
          %p952 = pneg %p135
        $region65: #{fc1_forward.1} parent=50 // pred_check_branch
          %954 = sbr.rel (%p952) target = $region67
        $region66: #{fc1_forward.1} parent=50 // pred_region
          %s955 = smul.u32 16, %s19
        $region67: #{fc1_forward.1} parent=50 // pred_fallthru
          _
      $region51: #{fc1_forward.1} parent=5 // pred_fallthru
        _
      %p956 = scmp.le.s32.totalorder 2, %s9
      // Predicated region
      $region68: #{fc1_forward.1} parent=5 // pred_check
        %p957 = pneg %p956
      $region69: #{fc1_forward.1} parent=5 // pred_check_branch
        %959 = sbr.rel (%p957) target = $region71
      $region70: #{fc1_forward.1} parent=5 // pred_region
        %s960 = ssub.s32 %s9, 2
        // Predicated region
        $region72: #{fc1_forward.1} parent=70 // pred_check
          %p961 = pneg %p141
        $region73: #{fc1_forward.1} parent=70 // pred_check_branch
          %963 = sbr.rel (%p961) target = $region75
        $region74: #{fc1_forward.1} parent=70 // pred_region
          %s964 = smul.u32 16, %s22
          %p965 = scmp.lt.s32.totalorder %s964, 31
          %s966 = scalar_select %p965, %s964, 31
          %p967 = scmp.lt.s32.totalorder %s23, 0
          %s968 = scalar_select %p967, %s23, 0
          %s969 = sadd.s32 %s968, %s966
          %s970 = smul.addr %s969, 8
          %s971 = scalar_lea.vmem %s3, %s970
        $region75: #{fc1_forward.1} parent=70 // pred_fallthru
          _
      $region71: #{fc1_forward.1} parent=5 // pred_fallthru
        _
    $region6: #{fc1_forward.1} parent=1 // loop_footer
      %s13 = sadd.s32 1, %s9
    $region7: #{fc1_forward.1} parent=1 // loop_footer_branch
      %8 = sbr.rel target = $region3
    $region8: #{fc1_forward.1} parent=1 // loop_exit
      _

</llo_original>
